<compile_context>
chip_gen: v5e
topology: v5e:2x2
jax: 0.10.0
libtpu: 0.0.40
codegen_flags: <defaults>
</compile_context>

<pallas_src>
import jax
import jax.numpy as jnp
from jax.experimental import pallas as pl
from jax.experimental.pallas import tpu as pltpu


def convglu_kernel(w_ref, b_ref, p_ref, o_ref):
    # w_ref: (C2, Kpad)  bf16   flattened conv weights (resident across grid)
    # b_ref: (C2, 1)     f32    conv bias
    # p_ref: (Kpad, TM)  bf16   transposed im2col patches for this row tile
    # o_ref: (Cout, TM)  f32    GLU output tile (lane-dense: TM % 128 == 0)
    cout = o_ref.shape[0]
    acc = jnp.dot(w_ref[...], p_ref[...], preferred_element_type=jnp.float32)
    acc = acc + b_ref[...]                       # (C2, TM) + (C2, 1) broadcast
    a = acc[:cout, :]                            # sublane split (GLU halves)
    g = acc[cout:, :]
    o_ref[...] = (a * jax.nn.sigmoid(g)).astype(o_ref.dtype)


def _pick_row_tile(hw, kpad, itemsize=2, budget=8 << 20):
    """Largest lane-aligned row tile dividing `hw` whose double-buffered patch
    tile stays well inside the scoped-VMEM default (v7x: 64 MiB physical)."""
    divisors = [tm for tm in (1024, 512, 256, 128) if hw % tm == 0]
    for tm in divisors:
        if 2 * tm * kpad * itemsize <= budget:
            return tm
    return divisors[-1] if divisors else hw      # block == full dim is allowed


def conv_glu(x_nchw, weight_oihw, bias, padding):
    """ConvGLU forward. x_nchw: (N, Cin, H, W); weight: (2*Cout, Cin, KH, KW)."""
    N, Cin, H, W = x_nchw.shape
    C2, _, KH, KW = weight_oihw.shape
    Cout = C2 // 2
    ph, pw = padding
    HW = H * W
    K = KH * KW * Cin
    Kpad = max(128, ((K + 127) // 128) * 128)    # aligned contraction dim

    # --- glue: spatial zero-pad + TRANSPOSED im2col (stays in NCHW, no
    #     transposes needed anywhere in the wrapper) ---------------------------
    # patches[n, (kh*KW + kw)*Cin + cin, h*W + w] = xpad[n, cin, h+kh, w+kw]
    xp = jnp.pad(x_nchw, ((0, 0), (0, 0), (ph, ph), (pw, pw)))
    patches = jnp.stack(
        [xp[:, :, kh:kh + H, kw:kw + W] for kh in range(KH) for kw in range(KW)],
        axis=1,
    )                                            # (N, KH*KW, Cin, H, W)
    patches = patches.reshape(N, K, HW)
    patches = jnp.pad(patches, ((0, 0), (0, Kpad - K), (0, 0)))
    patches = patches.astype(jnp.bfloat16)       # bf16 MXU operand

    # w_flat[c2, (kh*KW + kw)*Cin + cin] = weight[c2, cin, kh, kw]
    w_flat = jnp.transpose(weight_oihw, (0, 2, 3, 1)).reshape(C2, K)
    w_flat = jnp.pad(w_flat, ((0, 0), (0, Kpad - K))).astype(jnp.bfloat16)
    b2d = bias.reshape(C2, 1).astype(jnp.float32)

    TM = _pick_row_tile(HW, Kpad)
    grid = (N, HW // TM)

    cost = pl.CostEstimate(
        flops=2 * N * HW * Kpad * C2,
        transcendentals=N * HW * Cout,           # one sigmoid per output elem
        bytes_accessed=(patches.size * 2 + w_flat.size * 2
                        + b2d.size * 4 + N * Cout * HW * 4),
    )

    out_flat = pl.pallas_call(
        convglu_kernel,
        out_shape=jax.ShapeDtypeStruct((N, Cout, HW), jnp.float32),
        grid_spec=pltpu.PrefetchScalarGridSpec(
            num_scalar_prefetch=0,
            grid=grid,
            in_specs=[
                pl.BlockSpec((C2, Kpad), lambda n, j: (0, 0)),
                pl.BlockSpec((C2, 1), lambda n, j: (0, 0)),
                pl.BlockSpec((pl.Squeezed(), Kpad, TM), lambda n, j: (n, 0, j)),
            ],
            out_specs=pl.BlockSpec((pl.Squeezed(), Cout, TM),
                                   lambda n, j: (n, 0, j)),
        ),
        compiler_params=pltpu.CompilerParams(
            dimension_semantics=("parallel", "parallel"),
        ),
        cost_estimate=cost,
    )(w_flat, b2d, patches)

    # --- glue: (N, Cout, H*W) -> NCHW, pure reshape, no transpose ------------
    return out_flat.reshape(N, Cout, H, W)


def reference_conv_glu(x_nchw, weight_oihw, bias, padding):
    """Pure-JAX reference matching PyTorch semantics (f32 throughout)."""
    y = jax.lax.conv_general_dilated(
        x_nchw, weight_oihw,
        window_strides=(1, 1),
        padding=[(padding[0], padding[0]), (padding[1], padding[1])],
        dimension_numbers=("NCHW", "OIHW", "NCHW"),
    ) + bias[None, :, None, None]
    ch = y.shape[1]
    return y[:, : ch // 2] * jax.nn.sigmoid(y[:, ch // 2:])


if __name__ == "__main__":
    # Module config: ConvGLU(in_ch=4, out_ch=4, kernel_size=(7,7)) -> padding (3,3)
    N, Cin, H, W = 2, 4, 16, 16
    out_ch = 4
    KH, KW = 7, 7
    padding = (KH // 2, KW // 2)

    key = jax.random.PRNGKey(0)
    kx, kw, kb = jax.random.split(key, 3)

    x = jax.random.normal(kx, (N, Cin, H, W), dtype=jnp.float32)

    # Deterministic init mimicking nn.Conv2d default (uniform +- 1/sqrt(fan_in)).
    fan_in = Cin * KH * KW
    bound = 1.0 / (fan_in ** 0.5)
    weight = jax.random.uniform(kw, (2 * out_ch, Cin, KH, KW),
                                minval=-bound, maxval=bound, dtype=jnp.float32)
    bias = jax.random.uniform(kb, (2 * out_ch,),
                              minval=-bound, maxval=bound, dtype=jnp.float32)

    out = jax.block_until_ready(conv_glu(x, weight, bias, padding))
    ref = jax.block_until_ready(reference_conv_glu(x, weight, bias, padding))

    assert out.shape == (N, out_ch, H, W), out.shape
    # bf16 MXU operands with f32 accumulation -> loosen the pure-f32 tolerance.
    max_err = float(jnp.max(jnp.abs(out - ref)))
    assert jnp.allclose(out, ref, atol=3e-2, rtol=3e-2), max_err

    print("KERNEL_OK")
</pallas_src>

<mosaic_0001>
module attributes {stable_mosaic.version = 11 : i64} {
  func.func @convglu_kernel(%arg0: i32, %arg1: i32, %arg2: memref<8x256xbf16, #tpu.memory_space<vmem>>, %arg3: memref<8x1xf32, #tpu.memory_space<vmem>>, %arg4: memref<1x256x256xbf16, #tpu.memory_space<vmem>>, %arg5: memref<1x4x256xf32, #tpu.memory_space<vmem>>) attributes {dimension_semantics = [#tpu.dimension_semantics<parallel>, #tpu.dimension_semantics<parallel>], iteration_bounds = array<i64: 2, 1>, scalar_prefetch = 0 : i64, scratch_operands = 0 : i64, tpu.core_type = #tpu.core_type<tc>, window_params = [{pipeline_mode = #tpu.pipeline_mode<synchronous>, transform_indices = @transform_0, window_bounds = array<i64: 8, 256>}, {pipeline_mode = #tpu.pipeline_mode<synchronous>, transform_indices = @transform_1, window_bounds = array<i64: 8, 1>}, {transform_indices = @transform_2, window_bounds = array<i64: 1, 256, 256>}, {transform_indices = @transform_3, window_bounds = array<i64: 1, 4, 256>}]} {
    %c0 = arith.constant 0 : index
    %c0_0 = arith.constant 0 : index
    %0 = vector.load %arg2[%c0, %c0_0] : memref<8x256xbf16, #tpu.memory_space<vmem>>, vector<8x256xbf16>
    %c0_1 = arith.constant 0 : index
    %c0_2 = arith.constant 0 : index
    %c0_3 = arith.constant 0 : index
    %1 = vector.load %arg4[%c0_1, %c0_2, %c0_3] : memref<1x256x256xbf16, #tpu.memory_space<vmem>>, vector<1x256x256xbf16>
    %2 = vector.shape_cast %1 : vector<1x256x256xbf16> to vector<256x256xbf16>
    %cst = arith.constant dense<0.000000e+00> : vector<8x256xf32>
    %3 = tpu.matmul %0, %2, %cst {dimension_numbers = #tpu.dot_dimension_numbers<[1], [0], [0], [1], [0, 0, 1, 1], [], []>} : vector<8x256xbf16>, vector<256x256xbf16>, vector<8x256xf32> -> vector<8x256xf32>
    %c0_4 = arith.constant 0 : index
    %c0_5 = arith.constant 0 : index
    %4 = vector.load %arg3[%c0_4, %c0_5] : memref<8x1xf32, #tpu.memory_space<vmem>>, vector<8x1xf32>
    %5 = vector.broadcast %4 : vector<8x1xf32> to vector<8x256xf32>
    %6 = arith.addf %3, %5 : vector<8x256xf32>
    %7 = vector.extract_strided_slice %6 {offsets = [0, 0], sizes = [4, 256], strides = [1, 1]} : vector<8x256xf32> to vector<4x256xf32>
    %8 = vector.extract_strided_slice %6 {offsets = [4, 0], sizes = [4, 256], strides = [1, 1]} : vector<8x256xf32> to vector<4x256xf32>
    %9 = arith.negf %8 : vector<4x256xf32>
    %10 = math.exp %9 : vector<4x256xf32>
    %cst_6 = arith.constant 1.000000e+00 : f32
    %11 = vector.broadcast %cst_6 : f32 to vector<4x256xf32>
    %12 = arith.addf %11, %10 : vector<4x256xf32>
    %13 = arith.divf %11, %12 : vector<4x256xf32>
    %14 = arith.mulf %7, %13 : vector<4x256xf32>
    %c0_7 = arith.constant 0 : index
    %c0_8 = arith.constant 0 : index
    %c0_9 = arith.constant 0 : index
    %15 = vector.load %arg5[%c0_7, %c0_8, %c0_9] : memref<1x4x256xf32, #tpu.memory_space<vmem>>, vector<1x4x256xf32>
    %16 = vector.shape_cast %15 : vector<1x4x256xf32> to vector<4x256xf32>
    %17 = vector.shape_cast %14 : vector<4x256xf32> to vector<1x4x256xf32>
    tpu.vector_store %arg5[%c0_7, %c0_8, %c0_9], %17 {strides = array<i32>} : memref<1x4x256xf32, #tpu.memory_space<vmem>>, vector<1x4x256xf32>,
    return
  }
  func.func @transform_0(%arg0: i32, %arg1: i32) -> (i32, i32) {
    %c0_i32 = arith.constant 0 : i32
    %c0_i32_0 = arith.constant 0 : i32
    %c0_i32_1 = arith.constant 0 : i32
    return %c0_i32, %c0_i32_0 : i32, i32
  }
  func.func @transform_1(%arg0: i32, %arg1: i32) -> (i32, i32) {
    %c0_i32 = arith.constant 0 : i32
    %c0_i32_0 = arith.constant 0 : i32
    %c0_i32_1 = arith.constant 0 : i32
    return %c0_i32, %c0_i32_0 : i32, i32
  }
  func.func @transform_2(%arg0: i32, %arg1: i32) -> (i32, i32, i32) {
    %c0_i32 = arith.constant 0 : i32
    %c0_i32_0 = arith.constant 0 : i32
    return %arg0, %c0_i32, %arg1 : i32, i32, i32
  }
  func.func @transform_3(%arg0: i32, %arg1: i32) -> (i32, i32, i32) {
    %c0_i32 = arith.constant 0 : i32
    %c0_i32_0 = arith.constant 0 : i32
    return %arg0, %c0_i32, %arg1 : i32, i32, i32
  }
}

</mosaic_0001>

<llo_original>
// kernel: tpu_custom_call.1
$region0: #{tpu_custom_call.1}
  #allocation0 [shape = 'u32[]', space=smem, size = 0x4, offset = 0x4, fixed_abs, tag = 'smem constant byte address 0x4 - core index']
  #allocation1 [shape = 'u32[72,128]{1,0:T(1,128)}', space=vmem, size = 0x9000, scoped, tag = 'internal scratch']
  %s0 = inlined_call_operand.vmem [shape: bf16[8,256], index: 0, kind: input, shape index: {}]
  %s1 = inlined_call_operand.vmem [shape: f32[8,1], index: 1, kind: input, shape index: {}]
  %s2 = inlined_call_operand.hbm [shape: bf16[2,256,256], index: 2, kind: input, shape index: {}]
  %s3 = inlined_call_operand.hbm [shape: f32[2,4,256], index: 3, kind: output, shape index: {}]
  %s4 = sld [smem:[#allocation0]]
  $region49: #{tpu_custom_call.1} parent=0
    _
  %s6 = ssub.s32 1, %s4
  %s7 = scalar_select 0, %s6, %s4
  $region1: #{tpu_custom_call.1} parent=0
    #allocation2 [shape = 'u8[262144]{0}', space=vmem, size = 0x40000, scoped, tag = 'input window, operand 2']
    #allocation3 [shape = 's32[2]{0}', space=sflag, size = 0x8, scoped, tag = 'scoped memory for tpu_custom_call.1']
    #allocation4 [shape = 's32[2]{0}', space=sflag, size = 0x8, scoped, tag = 'scoped memory for tpu_custom_call.1']
    #allocation5 [shape = 'u8[8192]{0}', space=vmem, size = 0x2000, scoped, tag = 'output window, operand 0']
    %8 = vsyncpa [#allocation3], 0
    %s9 = scalar_lea.sflag [#allocation3], 1
    %10 = vsyncpa %s9, 0
    %11 = vsyncpa [#allocation4], 0
    %s12 = scalar_lea.sflag [#allocation4], 1
    %13 = vsyncpa %s12, 0
    loop: start=0, step=1, limit=4
    $region2: #{tpu_custom_call.1} parent=1 // loop_pre_header
      _
    $region3: #{tpu_custom_call.1} parent=1 // loop_header
      %s15 = sphi 0, %s19
      %p16 = scmp.ge.s32.totalorder %s15, 4
      %s22 = sphi 0, %s34
      %s23 = sphi 0, %s30
      %s24 = sphi 0, %s22
      %s25 = sphi 0, %s23
      %s26 = sphi 0, %s24
      %s27 = sphi 0, %s25
      %s35 = sphi 0, %s35
      %s37 = sphi 0, %s35
      %s38 = sphi 0, %s37
      %s52 = sphi 0, %s38
      %s56 = sphi 0, %s56
      %s58 = sphi 0, %s56
      %s59 = sphi 0, %s58
      %s73 = sphi 0, %s59
      %s81 = sphi 0, %s83
      %s84 = sphi 0, %s81
      %s85 = sphi 0, %s84
      %s101 = sphi 0, %s85
      %s109 = sphi 0, %s111
      %s112 = sphi 0, %s109
      %s113 = sphi 0, %s112
      %s129 = sphi 0, %s113
    $region4: #{tpu_custom_call.1} parent=1 // loop_header_branch
      %18 = sbr.rel (%p16) target = $region8
    $region5: #{tpu_custom_call.1} parent=1 // loop_body
      %s20 = ssub.s32 %s15, 1
      %s21 = ssub.s32 %s15, 2
      %s28 = sadd.s32 1, %s23
      %p29 = scmp.ge.s32.totalorder %s28, 1
      %s30 = scalar_select %p29, 0, %s28
      %s31 = sadd.s32 1, %s22
      %s32 = scalar_select %p29, %s31, %s22
      %p33 = scmp.ge.s32.totalorder %s32, 2
      %s34 = scalar_select %p33, 0, %s32
      %s36 = sadd.s32 %s35, 1
      %p39 = scmp.eq.s32.totalorder %s15, 1
      %p40 = scmp.ne.s32.totalorder %s35, %s37
      %p41 = scmp.eq.s32.totalorder %s15, 0
      %p42 = por %p40, %p41
      %p43 = scmp.ne.s32.totalorder %s35, %s37
      %p44 = scmp.eq.s32.totalorder %s20, 1
      %p45 = por %p43, %p44
      %p46 = scmp.ne.s32.totalorder %s37, %s38
      %p47 = scmp.eq.s32.totalorder %s20, 0
      %p48 = por %p46, %p47
      %p49 = scmp.ne.s32.totalorder %s37, %s38
      %p50 = scmp.eq.s32.totalorder %s21, 1
      %p51 = por %p49, %p50
      %p53 = scmp.ne.s32.totalorder %s38, %s52
      %p54 = scmp.eq.s32.totalorder %s21, 0
      %p55 = por %p53, %p54
      %s57 = sadd.s32 %s56, 1
      %p60 = scmp.eq.s32.totalorder %s15, 1
      %p61 = scmp.ne.s32.totalorder %s56, %s58
      %p62 = scmp.eq.s32.totalorder %s15, 0
      %p63 = por %p61, %p62
      %p64 = scmp.ne.s32.totalorder %s56, %s58
      %p65 = scmp.eq.s32.totalorder %s20, 1
      %p66 = por %p64, %p65
      %p67 = scmp.ne.s32.totalorder %s58, %s59
      %p68 = scmp.eq.s32.totalorder %s20, 0
      %p69 = por %p67, %p68
      %p70 = scmp.ne.s32.totalorder %s58, %s59
      %p71 = scmp.eq.s32.totalorder %s21, 1
      %p72 = por %p70, %p71
      %p74 = scmp.ne.s32.totalorder %s59, %s73
      %p75 = scmp.eq.s32.totalorder %s21, 0
      %p76 = por %p74, %p75
      %s77 = ssub.s32 %s22, %s34
      %s78 = ssub.s32 %s23, %s30
      %s79 = sor.u32 %s77, %s78
      %p80 = scmp.eq.s32.totalorder %s79, 0
      %s82 = sadd.s32 %s81, 1
      %s83 = scalar_select %p80, %s81, %s82
      %p86 = pneg %p80
      %p87 = scmp.eq.s32.totalorder %s15, 1
      %p88 = por %p86, %p87
      %p89 = scmp.ne.s32.totalorder %s81, %s84
      %p90 = scmp.eq.s32.totalorder %s15, 0
      %p91 = por %p89, %p90
      %p92 = scmp.ne.s32.totalorder %s81, %s84
      %p93 = scmp.eq.s32.totalorder %s20, 1
      %p94 = por %p92, %p93
      %p95 = scmp.ne.s32.totalorder %s84, %s85
      %p96 = scmp.eq.s32.totalorder %s20, 0
      %p97 = por %p95, %p96
      %p98 = scmp.ne.s32.totalorder %s84, %s85
      %p99 = scmp.eq.s32.totalorder %s21, 1
      %p100 = por %p98, %p99
      %p102 = scmp.ne.s32.totalorder %s85, %s101
      %p103 = scmp.eq.s32.totalorder %s21, 0
      %p104 = por %p102, %p103
      %s105 = ssub.s32 %s22, %s34
      %s106 = ssub.s32 %s23, %s30
      %s107 = sor.u32 %s105, %s106
      %p108 = scmp.eq.s32.totalorder %s107, 0
      %s110 = sadd.s32 %s109, 1
      %s111 = scalar_select %p108, %s109, %s110
      %p114 = pneg %p108
      %p115 = scmp.eq.s32.totalorder %s15, 1
      %p116 = por %p114, %p115
      %p117 = scmp.ne.s32.totalorder %s109, %s112
      %p118 = scmp.eq.s32.totalorder %s15, 0
      %p119 = por %p117, %p118
      %p120 = scmp.ne.s32.totalorder %s109, %s112
      %p121 = scmp.eq.s32.totalorder %s20, 1
      %p122 = por %p120, %p121
      %p123 = scmp.ne.s32.totalorder %s112, %s113
      %p124 = scmp.eq.s32.totalorder %s20, 0
      %p125 = por %p123, %p124
      %p126 = scmp.ne.s32.totalorder %s112, %s113
      %p127 = scmp.eq.s32.totalorder %s21, 1
      %p128 = por %p126, %p127
      %p130 = scmp.ne.s32.totalorder %s113, %s129
      %p131 = scmp.eq.s32.totalorder %s21, 0
      %p132 = por %p130, %p131
      %p133 = scmp.le.s32.totalorder 1, %s15
      %p134 = scmp.lt.s32.totalorder %s15, 3
      %p135 = pnand %p133, %p134
      %p136 = pneg %p135
      // Predicated region
      $region9: #{tpu_custom_call.1} parent=5 // pred_check
        _
      $region10: #{tpu_custom_call.1} parent=5 // pred_check_branch
        %138 = sbr.rel (%p135) target = $region12
      $region11: #{tpu_custom_call.1} parent=5 // pred_region
        %s139 = ssub.s32 %s15, 1
        // Predicated region
        $region13: #{tpu_custom_call.1} parent=11 // pred_check
          %p140 = pneg %p48
        $region14: #{tpu_custom_call.1} parent=11 // pred_check_branch
          %142 = sbr.rel (%p140) target = $region16
        $region15: #{tpu_custom_call.1} parent=11 // pred_region
          _
        $region16: #{tpu_custom_call.1} parent=11 // pred_fallthru
          _
        // Predicated region
        $region17: #{tpu_custom_call.1} parent=11 // pred_check
          %p143 = pneg %p69
        $region18: #{tpu_custom_call.1} parent=11 // pred_check_branch
          %145 = sbr.rel (%p143) target = $region20
        $region19: #{tpu_custom_call.1} parent=11 // pred_region
          _
        $region20: #{tpu_custom_call.1} parent=11 // pred_fallthru
          _
      $region12: #{tpu_custom_call.1} parent=5 // pred_fallthru
        _
      %p146 = scmp.lt.s32.totalorder %s15, 2
      // Predicated region
      $region21: #{tpu_custom_call.1} parent=5 // pred_check
        %p147 = pneg %p146
      $region22: #{tpu_custom_call.1} parent=5 // pred_check_branch
        %149 = sbr.rel (%p147) target = $region24
      $region23: #{tpu_custom_call.1} parent=5 // pred_region
        // Predicated region
        $region25: #{tpu_custom_call.1} parent=23 // pred_check
          %p150 = pneg %p91
        $region26: #{tpu_custom_call.1} parent=23 // pred_check_branch
          %152 = sbr.rel (%p150) target = $region28
        $region27: #{tpu_custom_call.1} parent=23 // pred_region
          %s153 = sand.u32 %s81, 1
          %s154 = scalar_lea.sflag [#allocation3], %s153
          %s155 = sand.u32 %s81, 1
          %s156 = smul.addr %s155, 256
          %s157 = scalar_lea.vmem [#allocation2], %s156
          %s158 = smul.u32 2, %s23
          %160 = vsyncadd %s154, 0
          %s161 = smul.addr %s22, 64
          %s162 = sadd.s32 %s158, %s161
          %s163 = smul.addr %s162, 4
          %s164 = scalar_lea.hbm %s2, %s163
          %s165 = sshll.u32 %s164, 4
          %s166 = int_to_ptr.hbm [resolvable:$true] %s165
          %s167 = sshll.u32 %s157, 4
          %s168 = int_to_ptr.vmem [resolvable:$true] %s167
          %173 = dma.hbm_to_vmem [thread:$0]  %s166, 4096, %s168, %s154, 128, 128, 8
        $region28: #{tpu_custom_call.1} parent=23 // pred_fallthru
          _
      $region24: #{tpu_custom_call.1} parent=5 // pred_fallthru
        _
      %p174 = scmp.le.s32.totalorder 1, %s15
      %p175 = scmp.lt.s32.totalorder %s15, 3
      %p176 = pnand %p174, %p175
      %p177 = pneg %p176
      // Predicated region
      $region29: #{tpu_custom_call.1} parent=5 // pred_check
        _
      $region30: #{tpu_custom_call.1} parent=5 // pred_check_branch
        %179 = sbr.rel (%p176) target = $region32
      $region31: #{tpu_custom_call.1} parent=5 // pred_region
        %s180 = ssub.s32 %s15, 1
        %s181 = sand.u32 %s84, 1
        %s182 = scalar_lea.sflag [#allocation3], %s181
        %s183 = sand.u32 %s84, 1
        %s184 = smul.addr %s183, 256
        %s185 = scalar_lea.vmem [#allocation2], %s184
        // Predicated region
        $region33: #{tpu_custom_call.1} parent=31 // pred_check
          %p186 = pneg %p97
        $region34: #{tpu_custom_call.1} parent=31 // pred_check_branch
          %188 = sbr.rel (%p186) target = $region36
        $region35: #{tpu_custom_call.1} parent=31 // pred_region
          %190 = dma.done %s182, 4096
        $region36: #{tpu_custom_call.1} parent=31 // pred_fallthru
          _
        %p191 = pneg %p48
        %p192 = pneg %p45
        %p193 = pneg %p69
        %p194 = pneg %p66
        %s195 = sand.u32 %s84, 1
        %s196 = scalar_lea.sflag [#allocation3], %s195
        %s197 = sand.u32 %s84, 1
        %s198 = smul.addr %s197, 256
        %s199 = scalar_lea.vmem [#allocation2], %s198
        %p200 = pneg %p97
        %p201 = pneg %p94
        %p202 = pneg %p125
        %p203 = pneg %p122
        %s204 = sand.u32 %s112, 1
        %s205 = scalar_lea.sflag [#allocation4], %s204
        %s206 = sand.u32 %s112, 1
        %s207 = smul.addr %s206, 8
        %s208 = scalar_lea.vmem [#allocation5], %s207
        %s209 = smul.u32 2, %s25
        %s210 = smul.u32 2, %s25
        %v211 = vld [vmem:[%s0] sm:$0xff]
        %v212 = vld [vmem:[%s185] sm:$0xff]
        %v213 = vld [vmem:[%s185 + $0x8] sm:$0xff]
        %v214 = vld [vmem:[%s185 + $0x10] sm:$0xff]
        %v215 = vld [vmem:[%s185 + $0x18] sm:$0xff]
        %v216 = vld [vmem:[%s185 + $0x20] sm:$0xff]
        %v217 = vld [vmem:[%s185 + $0x28] sm:$0xff]
        %v218 = vld [vmem:[%s185 + $0x30] sm:$0xff]
        %v219 = vld [vmem:[%s185 + $0x38] sm:$0xff]
        %v220 = vld [vmem:[%s185 + $0x40] sm:$0xff]
        %v221 = vld [vmem:[%s185 + $0x48] sm:$0xff]
        %v222 = vld [vmem:[%s185 + $0x50] sm:$0xff]
        %v223 = vld [vmem:[%s185 + $0x58] sm:$0xff]
        %v224 = vld [vmem:[%s185 + $0x60] sm:$0xff]
        %v225 = vld [vmem:[%s185 + $0x68] sm:$0xff]
        %v226 = vld [vmem:[%s185 + $0x70] sm:$0xff]
        %v227 = vld [vmem:[%s185 + $0x78] sm:$0xff]
        %v228 = vld [vmem:[%s185 + $0x80] sm:$0xff]
        %v229 = vld [vmem:[%s185 + $0x88] sm:$0xff]
        %v230 = vld [vmem:[%s185 + $0x90] sm:$0xff]
        %v231 = vld [vmem:[%s185 + $0x98] sm:$0xff]
        %v232 = vld [vmem:[%s185 + $0xa0] sm:$0xff]
        %v233 = vld [vmem:[%s185 + $0xa8] sm:$0xff]
        %v234 = vld [vmem:[%s185 + $0xb0] sm:$0xff]
        %v235 = vld [vmem:[%s185 + $0xb8] sm:$0xff]
        %v236 = vld [vmem:[%s185 + $0xc0] sm:$0xff]
        %v237 = vld [vmem:[%s185 + $0xc8] sm:$0xff]
        %v238 = vld [vmem:[%s185 + $0xd0] sm:$0xff]
        %v239 = vld [vmem:[%s185 + $0xd8] sm:$0xff]
        %v240 = vld [vmem:[%s185 + $0xe0] sm:$0xff]
        %v241 = vld [vmem:[%s185 + $0xe8] sm:$0xff]
        %v242 = vld [vmem:[%s185 + $0xf0] sm:$0xff]
        %v243 = vld [vmem:[%s185 + $0xf8] sm:$0xff]
        %v244 = vld [vmem:[%s1] sm:$0xff]
        %246 = vset.pattern.permute.xlu0 0
        %247 = vperm.xlu0 %246, %v244
        %v248 = vpop.permute.xlu0 %247
        %v251 = vunpack.c.l.b16 %v211
        %v252 = vunpack.c.h.b16 %v211
        %v253 = vpack.c.b16 %v251, %v251
        %v254 = vpack.c.b16 %v252, %v252
        %v289 = vunpack.c.l.b16 %v212
        %v290 = vunpack.c.h.b16 %v212
        %v291 = vunpack.c.l.b16 %v213
        %v292 = vunpack.c.h.b16 %v213
        %v293 = vunpack.c.l.b16 %v214
        %v294 = vunpack.c.h.b16 %v214
        %v295 = vunpack.c.l.b16 %v215
        %v296 = vunpack.c.h.b16 %v215
        %v297 = vunpack.c.l.b16 %v216
        %v298 = vunpack.c.h.b16 %v216
        %v299 = vunpack.c.l.b16 %v217
        %v300 = vunpack.c.h.b16 %v217
        %v301 = vunpack.c.l.b16 %v218
        %v302 = vunpack.c.h.b16 %v218
        %v303 = vunpack.c.l.b16 %v219
        %v304 = vunpack.c.h.b16 %v219
        %v305 = vunpack.c.l.b16 %v220
        %v306 = vunpack.c.h.b16 %v220
        %v307 = vunpack.c.l.b16 %v221
        %v308 = vunpack.c.h.b16 %v221
        %v309 = vunpack.c.l.b16 %v222
        %v310 = vunpack.c.h.b16 %v222
        %v311 = vunpack.c.l.b16 %v223
        %v312 = vunpack.c.h.b16 %v223
        %v313 = vunpack.c.l.b16 %v224
        %v314 = vunpack.c.h.b16 %v224
        %v315 = vunpack.c.l.b16 %v225
        %v316 = vunpack.c.h.b16 %v225
        %v317 = vunpack.c.l.b16 %v226
        %v318 = vunpack.c.h.b16 %v226
        %v319 = vunpack.c.l.b16 %v227
        %v320 = vunpack.c.h.b16 %v227
        %v321 = vunpack.c.l.b16 %v228
        %v322 = vunpack.c.h.b16 %v228
        %v323 = vunpack.c.l.b16 %v229
        %v324 = vunpack.c.h.b16 %v229
        %v325 = vunpack.c.l.b16 %v230
        %v326 = vunpack.c.h.b16 %v230
        %v327 = vunpack.c.l.b16 %v231
        %v328 = vunpack.c.h.b16 %v231
        %v329 = vunpack.c.l.b16 %v232
        %v330 = vunpack.c.h.b16 %v232
        %v331 = vunpack.c.l.b16 %v233
        %v332 = vunpack.c.h.b16 %v233
        %v333 = vunpack.c.l.b16 %v234
        %v334 = vunpack.c.h.b16 %v234
        %v335 = vunpack.c.l.b16 %v235
        %v336 = vunpack.c.h.b16 %v235
        %v337 = vunpack.c.l.b16 %v236
        %v338 = vunpack.c.h.b16 %v236
        %v339 = vunpack.c.l.b16 %v237
        %v340 = vunpack.c.h.b16 %v237
        %v341 = vunpack.c.l.b16 %v238
        %v342 = vunpack.c.h.b16 %v238
        %v343 = vunpack.c.l.b16 %v239
        %v344 = vunpack.c.h.b16 %v239
        %v345 = vunpack.c.l.b16 %v240
        %v346 = vunpack.c.h.b16 %v240
        %v347 = vunpack.c.l.b16 %v241
        %v348 = vunpack.c.h.b16 %v241
        %v349 = vunpack.c.l.b16 %v242
        %v350 = vunpack.c.h.b16 %v242
        %v351 = vunpack.c.l.b16 %v243
        %v352 = vunpack.c.h.b16 %v243
        %v353 = vpack.c.b16 %v291, %v289
        %v354 = vpack.c.b16 %v292, %v290
        %v355 = vpack.c.b16 %v295, %v293
        %v356 = vpack.c.b16 %v296, %v294
        %v357 = vpack.c.b16 %v299, %v297
        %v358 = vpack.c.b16 %v300, %v298
        %v359 = vpack.c.b16 %v303, %v301
        %v360 = vpack.c.b16 %v304, %v302
        %v361 = vpack.c.b16 %v307, %v305
        %v362 = vpack.c.b16 %v308, %v306
        %v363 = vpack.c.b16 %v311, %v309
        %v364 = vpack.c.b16 %v312, %v310
        %v365 = vpack.c.b16 %v315, %v313
        %v366 = vpack.c.b16 %v316, %v314
        %v367 = vpack.c.b16 %v319, %v317
        %v368 = vpack.c.b16 %v320, %v318
        %v369 = vpack.c.b16 %v323, %v321
        %v370 = vpack.c.b16 %v324, %v322
        %v371 = vpack.c.b16 %v327, %v325
        %v372 = vpack.c.b16 %v328, %v326
        %v373 = vpack.c.b16 %v331, %v329
        %v374 = vpack.c.b16 %v332, %v330
        %v375 = vpack.c.b16 %v335, %v333
        %v376 = vpack.c.b16 %v336, %v334
        %v377 = vpack.c.b16 %v339, %v337
        %v378 = vpack.c.b16 %v340, %v338
        %v379 = vpack.c.b16 %v343, %v341
        %v380 = vpack.c.b16 %v344, %v342
        %v381 = vpack.c.b16 %v347, %v345
        %v382 = vpack.c.b16 %v348, %v346
        %v383 = vpack.c.b16 %v351, %v349
        %v384 = vpack.c.b16 %v352, %v350
        %417 = vmatpush.bf16.msra.mxu0 %v367
        %418 = vmatpush.bf16.msra.mxu0 %v365
        %419 = vmatpush.bf16.msra.mxu0 %v363
        %420 = vmatpush.bf16.msra.mxu0 %v361
        %421 = vmatpush.bf16.msra.mxu0 %v359
        %422 = vmatpush.bf16.msra.mxu0 %v357
        %423 = vmatpush.bf16.msra.mxu0 %v355
        %424 = vmatpush.bf16.msra.mxu0 %v353
        %425 = vmatmul.bf16.gmra.mxu0 %v253
        %v426 = vpop.f32.mrf.mxu0
        %v427 = vadd.f32 %v248, %v426
        %v428 = vpop.f32.mrf.mxu0
        %429 = vdwg.mxu0
        %430 = vmatpush.bf16.msra.mxu0 %v383
        %431 = vmatpush.bf16.msra.mxu0 %v381
        %432 = vmatpush.bf16.msra.mxu0 %v379
        %433 = vmatpush.bf16.msra.mxu0 %v377
        %434 = vmatpush.bf16.msra.mxu0 %v375
        %435 = vmatpush.bf16.msra.mxu0 %v373
        %436 = vmatpush.bf16.msra.mxu0 %v371
        %437 = vmatpush.bf16.msra.mxu0 %v369
        %438 = vmatmul.bf16.gmra.mxu0 %v254
        %v439 = vpop.f32.mrf.mxu0
        %v440 = vadd.f32 %v427, %v439
        %v441 = vpop.f32.mrf.mxu0
        %442 = vdwg.mxu0
        %443 = vmatpush.bf16.msra.mxu0 %v368
        %444 = vmatpush.bf16.msra.mxu0 %v366
        %445 = vmatpush.bf16.msra.mxu0 %v364
        %446 = vmatpush.bf16.msra.mxu0 %v362
        %447 = vmatpush.bf16.msra.mxu0 %v360
        %448 = vmatpush.bf16.msra.mxu0 %v358
        %449 = vmatpush.bf16.msra.mxu0 %v356
        %450 = vmatpush.bf16.msra.mxu0 %v354
        %451 = vmatmul.bf16.gmra.mxu0 %v253
        %v452 = vpop.f32.mrf.mxu0
        %v453 = vadd.f32 %v248, %v452
        %v454 = vpop.f32.mrf.mxu0
        %455 = vdwg.mxu0
        %456 = vmatpush.bf16.msra.mxu0 %v384
        %457 = vmatpush.bf16.msra.mxu0 %v382
        %458 = vmatpush.bf16.msra.mxu0 %v380
        %459 = vmatpush.bf16.msra.mxu0 %v378
        %460 = vmatpush.bf16.msra.mxu0 %v376
        %461 = vmatpush.bf16.msra.mxu0 %v374
        %462 = vmatpush.bf16.msra.mxu0 %v372
        %463 = vmatpush.bf16.msra.mxu0 %v370
        %464 = vmatmul.bf16.gmra.mxu0 %v254
        %v465 = vpop.f32.mrf.mxu0
        %v466 = vadd.f32 %v453, %v465
        %v467 = vpop.f32.mrf.mxu0
        %468 = vdwg.mxu0
        %v469 = vxor.u32 %v440, 2147483648
        %v470 = vxor.u32 %v466, 2147483648
        %v471 = vmul.f32 %v469, 1.442695
        %v472 = vpow.pop %v471
        %v473 = vmul.f32 %v470, 1.442695
        %v474 = vpow.pop %v473
        %v475 = vadd.f32 %v472, 1.0
        %v476 = vadd.f32 %v474, 1.0
        %v477 = vrcp.pop %v475
        %v478 = vmul.f32 %v475, %v477
        %v479 = vsub.f32 1.0, %v478
        %v480 = vmul.f32 %v477, %v479
        %v481 = vadd.f32 %v477, %v480
        %vm482 = vweird.f32 %v475
        %vm483 = vweird.f32 %v477
        %vm484 = vmor %vm482, %vm483
        %v485 = vsel %vm484, %v477, %v481
        %v486 = vand.u32 2147483647, %v475
        %vm487 = vcmp.eq.f32.partialorder %v486, 8.507059e+37
        %v488 = vand.u32 %v475, 2147483648
        %v489 = vor.u32 1.1754944e-38, %v488
        %v490 = vsel %vm487, %v489, %v485
        %v491 = vmul.f32 1.0, %v490
        %v492 = vrcp.pop %v476
        %v493 = vmul.f32 %v476, %v492
        %v494 = vsub.f32 1.0, %v493
        %v495 = vmul.f32 %v492, %v494
        %v496 = vadd.f32 %v492, %v495
        %vm497 = vweird.f32 %v476
        %vm498 = vweird.f32 %v492
        %vm499 = vmor %vm497, %vm498
        %v500 = vsel %vm499, %v492, %v496
        %v501 = vand.u32 2147483647, %v476
        %vm502 = vcmp.eq.f32.partialorder %v501, 8.507059e+37
        %v503 = vand.u32 %v476, 2147483648
        %v504 = vor.u32 1.1754944e-38, %v503
        %v505 = vsel %vm502, %v504, %v500
        %v506 = vmul.f32 1.0, %v505
        %v509 = vrot.slane %v491, 4
        %v510 = vrot.slane %v506, 4
        %v513 = vmul.f32 %v440, %v509
        %v514 = vmul.f32 %v466, %v510
        %v517 = vrot.slane %v514, 4
        %vm518 = vcmask 1043456
        %v519 = vsel %vm518, %v513, %v517
        %521 = vst [vmem:[%s208] sm:$0xff] %v519
        %s522 = sand.u32 %s112, 1
        %s523 = scalar_lea.sflag [#allocation4], %s522
        %s524 = sand.u32 %s112, 1
        %s525 = smul.addr %s524, 8
        %s526 = scalar_lea.vmem [#allocation5], %s525
        // Predicated region
        $region37: #{tpu_custom_call.1} parent=31 // pred_check
          %p527 = pneg %p122
        $region38: #{tpu_custom_call.1} parent=31 // pred_check_branch
          %529 = sbr.rel (%p527) target = $region40
        $region39: #{tpu_custom_call.1} parent=31 // pred_region
          %s530 = smul.u32 2, %s25
          %532 = vsyncadd %s523, 0
          %s533 = smul.addr %s24, 2
          %s534 = sadd.s32 %s530, %s533
          %s535 = smul.addr %s534, 4
          %s536 = scalar_lea.hbm %s3, %s535
          %s538 = sshll.u32 %s526, 4
          %s539 = int_to_ptr.vmem [resolvable:$true] %s538
          %s540 = sshll.u32 %s536, 4
          %s541 = int_to_ptr.hbm [resolvable:$true] %s540
          %543 = dma.vmem_to_hbm [thread:$0]  %s539, 128, %s541, %s523
        $region40: #{tpu_custom_call.1} parent=31 // pred_fallthru
          _
      $region32: #{tpu_custom_call.1} parent=5 // pred_fallthru
        _
      %p544 = scmp.le.s32.totalorder 2, %s15
      // Predicated region
      $region41: #{tpu_custom_call.1} parent=5 // pred_check
        %p545 = pneg %p544
      $region42: #{tpu_custom_call.1} parent=5 // pred_check_branch
        %547 = sbr.rel (%p545) target = $region44
      $region43: #{tpu_custom_call.1} parent=5 // pred_region
        %s548 = ssub.s32 %s15, 2
        // Predicated region
        $region45: #{tpu_custom_call.1} parent=43 // pred_check
          %p549 = pneg %p128
        $region46: #{tpu_custom_call.1} parent=43 // pred_check_branch
          %551 = sbr.rel (%p549) target = $region48
        $region47: #{tpu_custom_call.1} parent=43 // pred_region
          %s552 = sand.u32 %s113, 1
          %s553 = scalar_lea.sflag [#allocation4], %s552
          %s554 = sand.u32 %s113, 1
          %s555 = smul.addr %s554, 8
          %s556 = scalar_lea.vmem [#allocation5], %s555
          %558 = dma.done %s553, 128
        $region48: #{tpu_custom_call.1} parent=43 // pred_fallthru
          _
      $region44: #{tpu_custom_call.1} parent=5 // pred_fallthru
        _
    $region6: #{tpu_custom_call.1} parent=1 // loop_footer
      %s19 = sadd.s32 1, %s15
    $region7: #{tpu_custom_call.1} parent=1 // loop_footer_branch
      %14 = sbr.rel target = $region3
    $region8: #{tpu_custom_call.1} parent=1 // loop_exit
      _
    %559 = vsyncpa [#allocation3], 1
    %s560 = scalar_lea.sflag [#allocation3], 1
    %561 = vsyncpa %s560, 1
    %562 = vsyncpa [#allocation4], 1
    %s563 = scalar_lea.sflag [#allocation4], 1
    %564 = vsyncpa %s563, 1

</llo_original>
